<compile_context>
chip_gen: v5e
topology: v5e:2x2
jax: 0.10.0
libtpu: 0.0.40
codegen_flags: <defaults>
</compile_context>

<pallas_src>
import functools

import jax
import jax.numpy as jnp
from jax.experimental import pallas as pl
from jax.experimental.pallas import tpu as pltpu

VECTOR_NORMALIZER = 20.0


def _atom_embedding_kernel(in_scalar,
                           sca_ref, vec_ref, w_sca_ref, b_sca_ref,
                           w_vec_ref, b_vec_ref,
                           sca_out_ref, vec_out_ref):
    # ---------------- scalar path: rows[:, :in_scalar] @ W + b ----------------
    sca = sca_ref[...]                  # (TN, F) with F >= in_scalar; extra cols unused
    w_s = w_sca_ref[...]                # (in_scalar, out_scalar)
    b_s = b_sca_ref[...]                # (1, out_scalar)
    if in_scalar <= 32:
        # tiny contraction: unrolled VPU FMAs (MXU would be <4% utilized at this K)
        acc = sca[:, 0:1] * w_s[0:1, :] + b_s
        for k in range(1, in_scalar):
            acc = acc + sca[:, k:k + 1] * w_s[k:k + 1, :]
    else:
        acc = jnp.dot(sca[:, :in_scalar], w_s,
                      preferred_element_type=jnp.float32) + b_s
    sca_out_ref[...] = acc

    # --------------- vector path: Linear(1, out_vector) per xyz ---------------
    # w_vec_ref is pre-arranged in the wrapper as (3, 3*out_vector) with
    #   w_vec_ref[i, k*3 + j] = w_vec[k]/normalizer if i == j else 0
    # so  out_flat[n, k*3 + j] = (vec[n, j]/norm) * w_vec[k] + b_vec[k]
    # and out_flat.reshape(N, out_vector, 3) is exactly the PyTorch layout.
    vec = vec_ref[...]                            # (TN, 3)
    w_v = w_vec_ref[...]                          # (3, 3*out_vector)
    acc_v = vec[:, 0:1] * w_v[0:1, :] + b_vec_ref[...]
    acc_v = acc_v + vec[:, 1:2] * w_v[1:2, :]
    acc_v = acc_v + vec[:, 2:3] * w_v[2:3, :]
    vec_out_ref[...] = acc_v


def atom_embedding(scalar_input, vector_input, params, *, in_scalar,
                   vector_normalizer=VECTOR_NORMALIZER, tile_n=1024):
    """scalar_input: (N, F>=in_scalar) f32, vector_input: (N, 3) f32."""
    w_sca, b_sca, w_vec, b_vec = params
    N, F = scalar_input.shape
    assert F >= in_scalar
    assert vector_input.shape == (N, 3), "Only one 3-vector per atom supported"
    out_scalar = w_sca.shape[1]
    out_vector = w_vec.shape[1]

    # --- tiny one-off weight re-layouts (XLA side, negligible) ---
    # interleaved, component-masked vector weights with 1/normalizer folded in:
    #   (3, 3*out_vector), w_vec_i[i, k*3+j] = (w_vec[k]/norm) * (i == j)
    eye3 = jnp.eye(3, dtype=w_vec.dtype)
    w_vec_scaled = w_vec[0] * jnp.float32(1.0 / float(vector_normalizer))
    w_vec_i = (w_vec_scaled[None, :, None] * eye3[:, None, :]).reshape(3, 3 * out_vector)
    b_vec_i = jnp.repeat(b_vec, 3, axis=1)                     # (1, 3*out_vector)

    # --- row tiling: large tiles, pad N up to a tile multiple if needed ---
    tile_n = max(8, min(int(tile_n), ((N + 7) // 8) * 8))
    tile_n = ((tile_n + 7) // 8) * 8
    n_pad = pl.cdiv(N, tile_n) * tile_n
    if n_pad != N:
        scalar_input = jnp.pad(scalar_input, ((0, n_pad - N), (0, 0)))
        vector_input = jnp.pad(vector_input, ((0, n_pad - N), (0, 0)))

    kernel = functools.partial(_atom_embedding_kernel, int(in_scalar))

    sca_emb, vec_flat = pl.pallas_call(
        kernel,
        out_shape=(
            jax.ShapeDtypeStruct((n_pad, out_scalar), jnp.float32),
            jax.ShapeDtypeStruct((n_pad, 3 * out_vector), jnp.float32),
        ),
        grid_spec=pltpu.PrefetchScalarGridSpec(
            num_scalar_prefetch=0,
            grid=(n_pad // tile_n,),
            in_specs=[
                pl.BlockSpec((tile_n, F), lambda i: (i, 0)),
                pl.BlockSpec((tile_n, 3), lambda i: (i, 0)),
                pl.BlockSpec((in_scalar, out_scalar), lambda i: (0, 0)),
                pl.BlockSpec((1, out_scalar), lambda i: (0, 0)),
                pl.BlockSpec((3, 3 * out_vector), lambda i: (0, 0)),
                pl.BlockSpec((1, 3 * out_vector), lambda i: (0, 0)),
            ],
            out_specs=[
                pl.BlockSpec((tile_n, out_scalar), lambda i: (i, 0)),
                pl.BlockSpec((tile_n, 3 * out_vector), lambda i: (i, 0)),
            ],
        ),
        compiler_params=pltpu.CompilerParams(
            dimension_semantics=("parallel",)),
    )(scalar_input, vector_input, w_sca, b_sca, w_vec_i, b_vec_i)

    if n_pad != N:
        sca_emb = sca_emb[:N]
        vec_flat = vec_flat[:N]
    # free reshape: flat index k*3 + j  ->  (N, out_vector, 3)  (PyTorch layout)
    vec_emb = vec_flat.reshape(N, out_vector, 3)
    return sca_emb, vec_emb


def init_params(key, in_scalar, out_scalar, out_vector):
    """Deterministic synthetic params (Linear weights stored pre-transposed)."""
    k1, k2, k3, k4 = jax.random.split(key, 4)
    w_sca = jax.random.normal(k1, (in_scalar, out_scalar), jnp.float32) * 0.1
    b_sca = jax.random.normal(k2, (1, out_scalar), jnp.float32) * 0.1
    w_vec = jax.random.normal(k3, (1, out_vector), jnp.float32) * 0.1
    b_vec = jax.random.normal(k4, (1, out_vector), jnp.float32) * 0.1
    return w_sca, b_sca, w_vec, b_vec


if __name__ == "__main__":
    in_scalar, in_vector = 4, 1
    out_scalar, out_vector = 32, 16
    N = 13                     # not a multiple of 8: exercises the padding path
    extra_feats = 2            # scalar_input has extra columns; forward uses [:, :in_scalar]

    key = jax.random.PRNGKey(0)
    kx, kv, kp = jax.random.split(key, 3)
    scalar_input = jax.random.normal(kx, (N, in_scalar + extra_feats), jnp.float32)
    vector_input = jax.random.normal(kv, (N, 3), jnp.float32)
    params = init_params(kp, in_scalar, out_scalar, out_vector)

    sca_emb, vec_emb = atom_embedding(scalar_input, vector_input, params,
                                      in_scalar=in_scalar)
    jax.block_until_ready((sca_emb, vec_emb))

    # reference check (plain JAX, mirrors the PyTorch forward)
    w_sca, b_sca, w_vec, b_vec = params
    ref_sca = scalar_input[:, :in_scalar] @ w_sca + b_sca
    v = vector_input / VECTOR_NORMALIZER
    ref_vec = jnp.transpose(
        v[:, :, None] * w_vec[0][None, None, :] + b_vec[0][None, None, :],
        (0, 2, 1))
    assert sca_emb.shape == (N, out_scalar)
    assert vec_emb.shape == (N, out_vector, 3)
    assert jnp.allclose(sca_emb, ref_sca, atol=1e-5)
    assert jnp.allclose(vec_emb, ref_vec, atol=1e-5)

    print("KERNEL_OK")
</pallas_src>

<mosaic_0001>
module attributes {stable_mosaic.version = 11 : i64} {
  func.func @_atom_embedding_kernel(%arg0: i32, %arg1: memref<16x6xf32, #tpu.memory_space<vmem>>, %arg2: memref<16x3xf32, #tpu.memory_space<vmem>>, %arg3: memref<4x32xf32, #tpu.memory_space<vmem>>, %arg4: memref<1x32xf32, #tpu.memory_space<vmem>>, %arg5: memref<3x48xf32, #tpu.memory_space<vmem>>, %arg6: memref<1x48xf32, #tpu.memory_space<vmem>>, %arg7: memref<16x32xf32, #tpu.memory_space<vmem>>, %arg8: memref<16x48xf32, #tpu.memory_space<vmem>>) attributes {dimension_semantics = [#tpu.dimension_semantics<parallel>], iteration_bounds = array<i64: 1>, scalar_prefetch = 0 : i64, scratch_operands = 0 : i64, tpu.core_type = #tpu.core_type<tc>, window_params = [{transform_indices = @transform_0, window_bounds = array<i64: 16, 6>}, {transform_indices = @transform_1, window_bounds = array<i64: 16, 3>}, {pipeline_mode = #tpu.pipeline_mode<synchronous>, transform_indices = @transform_2, window_bounds = array<i64: 4, 32>}, {pipeline_mode = #tpu.pipeline_mode<synchronous>, transform_indices = @transform_3, window_bounds = array<i64: 1, 32>}, {pipeline_mode = #tpu.pipeline_mode<synchronous>, transform_indices = @transform_4, window_bounds = array<i64: 3, 48>}, {pipeline_mode = #tpu.pipeline_mode<synchronous>, transform_indices = @transform_5, window_bounds = array<i64: 1, 48>}, {transform_indices = @transform_6, window_bounds = array<i64: 16, 32>}, {transform_indices = @transform_7, window_bounds = array<i64: 16, 48>}]} {
    %c0 = arith.constant 0 : index
    %c0_0 = arith.constant 0 : index
    %0 = vector.load %arg1[%c0, %c0_0] : memref<16x6xf32, #tpu.memory_space<vmem>>, vector<16x6xf32>
    %c0_1 = arith.constant 0 : index
    %c0_2 = arith.constant 0 : index
    %1 = vector.load %arg3[%c0_1, %c0_2] : memref<4x32xf32, #tpu.memory_space<vmem>>, vector<4x32xf32>
    %c0_3 = arith.constant 0 : index
    %c0_4 = arith.constant 0 : index
    %2 = vector.load %arg4[%c0_3, %c0_4] : memref<1x32xf32, #tpu.memory_space<vmem>>, vector<1x32xf32>
    %3 = vector.extract_strided_slice %0 {offsets = [0, 0], sizes = [16, 1], strides = [1, 1]} : vector<16x6xf32> to vector<16x1xf32>
    %4 = vector.extract_strided_slice %1 {offsets = [0, 0], sizes = [1, 32], strides = [1, 1]} : vector<4x32xf32> to vector<1x32xf32>
    %5 = vector.broadcast %3 : vector<16x1xf32> to vector<16x32xf32>
    %6 = vector.broadcast %4 : vector<1x32xf32> to vector<16x32xf32>
    %7 = arith.mulf %5, %6 : vector<16x32xf32>
    %8 = vector.broadcast %2 : vector<1x32xf32> to vector<16x32xf32>
    %9 = arith.addf %7, %8 : vector<16x32xf32>
    %10 = vector.extract_strided_slice %0 {offsets = [0, 1], sizes = [16, 1], strides = [1, 1]} : vector<16x6xf32> to vector<16x1xf32>
    %11 = vector.extract_strided_slice %1 {offsets = [1, 0], sizes = [1, 32], strides = [1, 1]} : vector<4x32xf32> to vector<1x32xf32>
    %12 = vector.broadcast %10 : vector<16x1xf32> to vector<16x32xf32>
    %13 = vector.broadcast %11 : vector<1x32xf32> to vector<16x32xf32>
    %14 = arith.mulf %12, %13 : vector<16x32xf32>
    %15 = arith.addf %9, %14 : vector<16x32xf32>
    %16 = vector.extract_strided_slice %0 {offsets = [0, 2], sizes = [16, 1], strides = [1, 1]} : vector<16x6xf32> to vector<16x1xf32>
    %17 = vector.extract_strided_slice %1 {offsets = [2, 0], sizes = [1, 32], strides = [1, 1]} : vector<4x32xf32> to vector<1x32xf32>
    %18 = vector.broadcast %16 : vector<16x1xf32> to vector<16x32xf32>
    %19 = vector.broadcast %17 : vector<1x32xf32> to vector<16x32xf32>
    %20 = arith.mulf %18, %19 : vector<16x32xf32>
    %21 = arith.addf %15, %20 : vector<16x32xf32>
    %22 = vector.extract_strided_slice %0 {offsets = [0, 3], sizes = [16, 1], strides = [1, 1]} : vector<16x6xf32> to vector<16x1xf32>
    %23 = vector.extract_strided_slice %1 {offsets = [3, 0], sizes = [1, 32], strides = [1, 1]} : vector<4x32xf32> to vector<1x32xf32>
    %24 = vector.broadcast %22 : vector<16x1xf32> to vector<16x32xf32>
    %25 = vector.broadcast %23 : vector<1x32xf32> to vector<16x32xf32>
    %26 = arith.mulf %24, %25 : vector<16x32xf32>
    %27 = arith.addf %21, %26 : vector<16x32xf32>
    %c0_5 = arith.constant 0 : index
    %c0_6 = arith.constant 0 : index
    %28 = vector.load %arg7[%c0_5, %c0_6] : memref<16x32xf32, #tpu.memory_space<vmem>>, vector<16x32xf32>
    tpu.vector_store %arg7[%c0_5, %c0_6], %27 {strides = array<i32>} : memref<16x32xf32, #tpu.memory_space<vmem>>, vector<16x32xf32>,
    %c0_7 = arith.constant 0 : index
    %c0_8 = arith.constant 0 : index
    %29 = vector.load %arg2[%c0_7, %c0_8] : memref<16x3xf32, #tpu.memory_space<vmem>>, vector<16x3xf32>
    %c0_9 = arith.constant 0 : index
    %c0_10 = arith.constant 0 : index
    %30 = vector.load %arg5[%c0_9, %c0_10] : memref<3x48xf32, #tpu.memory_space<vmem>>, vector<3x48xf32>
    %31 = vector.extract_strided_slice %29 {offsets = [0, 0], sizes = [16, 1], strides = [1, 1]} : vector<16x3xf32> to vector<16x1xf32>
    %32 = vector.extract_strided_slice %30 {offsets = [0, 0], sizes = [1, 48], strides = [1, 1]} : vector<3x48xf32> to vector<1x48xf32>
    %33 = vector.broadcast %31 : vector<16x1xf32> to vector<16x48xf32>
    %34 = vector.broadcast %32 : vector<1x48xf32> to vector<16x48xf32>
    %35 = arith.mulf %33, %34 : vector<16x48xf32>
    %c0_11 = arith.constant 0 : index
    %c0_12 = arith.constant 0 : index
    %36 = vector.load %arg6[%c0_11, %c0_12] : memref<1x48xf32, #tpu.memory_space<vmem>>, vector<1x48xf32>
    %37 = vector.broadcast %36 : vector<1x48xf32> to vector<16x48xf32>
    %38 = arith.addf %35, %37 : vector<16x48xf32>
    %39 = vector.extract_strided_slice %29 {offsets = [0, 1], sizes = [16, 1], strides = [1, 1]} : vector<16x3xf32> to vector<16x1xf32>
    %40 = vector.extract_strided_slice %30 {offsets = [1, 0], sizes = [1, 48], strides = [1, 1]} : vector<3x48xf32> to vector<1x48xf32>
    %41 = vector.broadcast %39 : vector<16x1xf32> to vector<16x48xf32>
    %42 = vector.broadcast %40 : vector<1x48xf32> to vector<16x48xf32>
    %43 = arith.mulf %41, %42 : vector<16x48xf32>
    %44 = arith.addf %38, %43 : vector<16x48xf32>
    %45 = vector.extract_strided_slice %29 {offsets = [0, 2], sizes = [16, 1], strides = [1, 1]} : vector<16x3xf32> to vector<16x1xf32>
    %46 = vector.extract_strided_slice %30 {offsets = [2, 0], sizes = [1, 48], strides = [1, 1]} : vector<3x48xf32> to vector<1x48xf32>
    %47 = vector.broadcast %45 : vector<16x1xf32> to vector<16x48xf32>
    %48 = vector.broadcast %46 : vector<1x48xf32> to vector<16x48xf32>
    %49 = arith.mulf %47, %48 : vector<16x48xf32>
    %50 = arith.addf %44, %49 : vector<16x48xf32>
    %c0_13 = arith.constant 0 : index
    %c0_14 = arith.constant 0 : index
    %51 = vector.load %arg8[%c0_13, %c0_14] : memref<16x48xf32, #tpu.memory_space<vmem>>, vector<16x48xf32>
    tpu.vector_store %arg8[%c0_13, %c0_14], %50 {strides = array<i32>} : memref<16x48xf32, #tpu.memory_space<vmem>>, vector<16x48xf32>,
    return
  }
  func.func @transform_0(%arg0: i32) -> (i32, i32) {
    %c0_i32 = arith.constant 0 : i32
    %c0_i32_0 = arith.constant 0 : i32
    return %arg0, %c0_i32 : i32, i32
  }
  func.func @transform_1(%arg0: i32) -> (i32, i32) {
    %c0_i32 = arith.constant 0 : i32
    %c0_i32_0 = arith.constant 0 : i32
    return %arg0, %c0_i32 : i32, i32
  }
  func.func @transform_2(%arg0: i32) -> (i32, i32) {
    %c0_i32 = arith.constant 0 : i32
    %c0_i32_0 = arith.constant 0 : i32
    %c0_i32_1 = arith.constant 0 : i32
    return %c0_i32, %c0_i32_0 : i32, i32
  }
  func.func @transform_3(%arg0: i32) -> (i32, i32) {
    %c0_i32 = arith.constant 0 : i32
    %c0_i32_0 = arith.constant 0 : i32
    %c0_i32_1 = arith.constant 0 : i32
    return %c0_i32, %c0_i32_0 : i32, i32
  }
  func.func @transform_4(%arg0: i32) -> (i32, i32) {
    %c0_i32 = arith.constant 0 : i32
    %c0_i32_0 = arith.constant 0 : i32
    %c0_i32_1 = arith.constant 0 : i32
    return %c0_i32, %c0_i32_0 : i32, i32
  }
  func.func @transform_5(%arg0: i32) -> (i32, i32) {
    %c0_i32 = arith.constant 0 : i32
    %c0_i32_0 = arith.constant 0 : i32
    %c0_i32_1 = arith.constant 0 : i32
    return %c0_i32, %c0_i32_0 : i32, i32
  }
  func.func @transform_6(%arg0: i32) -> (i32, i32) {
    %c0_i32 = arith.constant 0 : i32
    %c0_i32_0 = arith.constant 0 : i32
    return %arg0, %c0_i32 : i32, i32
  }
  func.func @transform_7(%arg0: i32) -> (i32, i32) {
    %c0_i32 = arith.constant 0 : i32
    %c0_i32_0 = arith.constant 0 : i32
    return %arg0, %c0_i32 : i32, i32
  }
}

</mosaic_0001>

<llo_original>
// kernel: tpu_custom_call.1
$region0: #{tpu_custom_call.1}
  #allocation0 [shape = 'u32[]', space=smem, size = 0x4, offset = 0x4, fixed_abs, tag = 'smem constant byte address 0x4 - core index']
  #allocation1 [shape = 'u32[72,128]{1,0:T(1,128)}', space=vmem, size = 0x9000, scoped, tag = 'internal scratch']
  %s0 = inlined_call_operand.vmem [shape: f32[16,6], index: 0, kind: input, shape index: {}]
  %s1 = inlined_call_operand.vmem [shape: f32[16,3], index: 1, kind: input, shape index: {}]
  %s2 = inlined_call_operand.vmem [shape: f32[4,32], index: 2, kind: input, shape index: {}]
  %s3 = inlined_call_operand.vmem [shape: f32[1,32], index: 3, kind: input, shape index: {}]
  %s4 = inlined_call_operand.vmem [shape: f32[3,48], index: 4, kind: input, shape index: {}]
  %s5 = inlined_call_operand.vmem [shape: f32[1,48], index: 5, kind: input, shape index: {}]
  %s6 = inlined_call_operand.hbm [shape: f32[16,32], index: 6, kind: output, shape index: {0}]
  %s7 = inlined_call_operand.hbm [shape: f32[16,48], index: 7, kind: output, shape index: {1}]
  %8 = xla_tuple %s6, %s7
  %s9 = sld [smem:[#allocation0]]
  $region42: #{tpu_custom_call.1} parent=0
    _
  %s11 = ssub.s32 1, %s9
  %s12 = scalar_select 0, %s11, %s9
  $region1: #{tpu_custom_call.1} parent=0
    #allocation2 [shape = 'u8[8192]{0}', space=vmem, size = 0x2000, scoped, tag = 'output window, operand 0, single buffered']
    #allocation3 [shape = 's32[1]{0}', space=sflag, size = 0x4, scoped, tag = 'scoped memory for tpu_custom_call.1']
    #allocation4 [shape = 'u8[8192]{0}', space=vmem, size = 0x2000, scoped, tag = 'output window, operand 1, single buffered']
    #allocation5 [shape = 's32[1]{0}', space=sflag, size = 0x4, scoped, tag = 'scoped memory for tpu_custom_call.1']
    %13 = vsyncpa [#allocation3], 0
    %14 = vsyncpa [#allocation5], 0
    // Predicated region
    $region2: #{tpu_custom_call.1} parent=1 // pred_check
      _
    $region3: #{tpu_custom_call.1} parent=1 // pred_check_branch
      %16 = sbr.rel (0) target = $region5
    $region4: #{tpu_custom_call.1} parent=1 // pred_region
      _
    $region5: #{tpu_custom_call.1} parent=1 // pred_fallthru
      _
    // Predicated region
    $region6: #{tpu_custom_call.1} parent=1 // pred_check
      _
    $region7: #{tpu_custom_call.1} parent=1 // pred_check_branch
      %18 = sbr.rel (0) target = $region9
    $region8: #{tpu_custom_call.1} parent=1 // pred_region
      _
    $region9: #{tpu_custom_call.1} parent=1 // pred_fallthru
      _
    // Predicated region
    $region10: #{tpu_custom_call.1} parent=1 // pred_check
      _
    $region11: #{tpu_custom_call.1} parent=1 // pred_check_branch
      %20 = sbr.rel (0) target = $region13
    $region12: #{tpu_custom_call.1} parent=1 // pred_region
      _
    $region13: #{tpu_custom_call.1} parent=1 // pred_fallthru
      _
    // Predicated region
    $region14: #{tpu_custom_call.1} parent=1 // pred_check
      _
    $region15: #{tpu_custom_call.1} parent=1 // pred_check_branch
      %22 = sbr.rel (0) target = $region17
    $region16: #{tpu_custom_call.1} parent=1 // pred_region
      _
    $region17: #{tpu_custom_call.1} parent=1 // pred_fallthru
      _
    // Predicated region
    $region18: #{tpu_custom_call.1} parent=1 // pred_check
      _
    $region19: #{tpu_custom_call.1} parent=1 // pred_check_branch
      %24 = sbr.rel (0) target = $region21
    $region20: #{tpu_custom_call.1} parent=1 // pred_region
      _
    $region21: #{tpu_custom_call.1} parent=1 // pred_fallthru
      _
    // Predicated region
    $region22: #{tpu_custom_call.1} parent=1 // pred_check
      _
    $region23: #{tpu_custom_call.1} parent=1 // pred_check_branch
      %26 = sbr.rel (0) target = $region25
    $region24: #{tpu_custom_call.1} parent=1 // pred_region
      _
    $region25: #{tpu_custom_call.1} parent=1 // pred_fallthru
      _
    %v27 = vld [vmem:[%s0] sm:$0xff]
    %v28 = vld [vmem:[%s0 + $0x8] sm:$0xff]
    %v29 = vld [vmem:[%s2] sm:$0xf]
    %v30 = vld [vmem:[%s3] sm:$0x1]
    %32 = vset.pattern.permute.xlu0 0
    %33 = vperm.xlu0 %32, %v27
    %v34 = vpop.permute.xlu0 %33
    %37 = vset.pattern.permute.xlu0 0
    %38 = vperm.xlu0 %37, %v28
    %v39 = vpop.permute.xlu0 %38
    %v41 = vperm.slane %v29, 0
    %v42 = vmul.f32 %v34, %v41
    %v43 = vmul.f32 %v39, %v41
    %v45 = vperm.slane %v30, 0
    %v47 = vadd.f32 %v42, %v45
    %v48 = vadd.f32 %v43, %v45
    %49 = vset.pattern.permute.xlu0 1
    %50 = vperm.xlu0 %49, %v27
    %v51 = vpop.permute.xlu0 %50
    %53 = vset.pattern.permute.xlu0 1
    %54 = vperm.xlu0 %53, %v28
    %v55 = vpop.permute.xlu0 %54
    %v57 = vperm.slane %v29, 1
    %v58 = vmul.f32 %v51, %v57
    %v59 = vmul.f32 %v55, %v57
    %v60 = vadd.f32 %v47, %v58
    %v61 = vadd.f32 %v48, %v59
    %62 = vset.pattern.permute.xlu0 2
    %63 = vperm.xlu0 %62, %v27
    %v64 = vpop.permute.xlu0 %63
    %66 = vset.pattern.permute.xlu0 2
    %67 = vperm.xlu0 %66, %v28
    %v68 = vpop.permute.xlu0 %67
    %v70 = vperm.slane %v29, 2
    %v71 = vmul.f32 %v64, %v70
    %v72 = vmul.f32 %v68, %v70
    %v73 = vadd.f32 %v60, %v71
    %v74 = vadd.f32 %v61, %v72
    %75 = vset.pattern.permute.xlu0 3
    %76 = vperm.xlu0 %75, %v27
    %v77 = vpop.permute.xlu0 %76
    %79 = vset.pattern.permute.xlu0 3
    %80 = vperm.xlu0 %79, %v28
    %v81 = vpop.permute.xlu0 %80
    %v83 = vperm.slane %v29, 3
    %v84 = vmul.f32 %v77, %v83
    %v85 = vmul.f32 %v81, %v83
    %v86 = vadd.f32 %v73, %v84
    %v87 = vadd.f32 %v74, %v85
    %vm88 = vcmask 261120
    %89 = vst.msk [vmem:[#allocation2] sm:$0xff] %vm88, %v86
    %90 = vst.msk [vmem:[#allocation2 + $0x8] sm:$0xff] %vm88, %v87
    %v91 = vld [vmem:[%s1] sm:$0xff]
    %v92 = vld [vmem:[%s1 + $0x8] sm:$0xff]
    %v93 = vld [vmem:[%s4] sm:$0x7]
    %95 = vset.pattern.permute.xlu0 0
    %96 = vperm.xlu0 %95, %v91
    %v97 = vpop.permute.xlu0 %96
    %100 = vset.pattern.permute.xlu0 0
    %101 = vperm.xlu0 %100, %v92
    %v102 = vpop.permute.xlu0 %101
    %v104 = vperm.slane %v93, 0
    %v105 = vmul.f32 %v97, %v104
    %v106 = vmul.f32 %v102, %v104
    %v107 = vld [vmem:[%s5] sm:$0x1]
    %v109 = vperm.slane %v107, 0
    %v111 = vadd.f32 %v105, %v109
    %v112 = vadd.f32 %v106, %v109
    %113 = vset.pattern.permute.xlu0 1
    %114 = vperm.xlu0 %113, %v91
    %v115 = vpop.permute.xlu0 %114
    %117 = vset.pattern.permute.xlu0 1
    %118 = vperm.xlu0 %117, %v92
    %v119 = vpop.permute.xlu0 %118
    %v121 = vperm.slane %v93, 1
    %v122 = vmul.f32 %v115, %v121
    %v123 = vmul.f32 %v119, %v121
    %v124 = vadd.f32 %v111, %v122
    %v125 = vadd.f32 %v112, %v123
    %126 = vset.pattern.permute.xlu0 2
    %127 = vperm.xlu0 %126, %v91
    %v128 = vpop.permute.xlu0 %127
    %130 = vset.pattern.permute.xlu0 2
    %131 = vperm.xlu0 %130, %v92
    %v132 = vpop.permute.xlu0 %131
    %v134 = vperm.slane %v93, 2
    %v135 = vmul.f32 %v128, %v134
    %v136 = vmul.f32 %v132, %v134
    %v137 = vadd.f32 %v124, %v135
    %v138 = vadd.f32 %v125, %v136
    %vm139 = vcmask 392192
    %140 = vst.msk [vmem:[#allocation4] sm:$0xff] %vm139, %v137
    %141 = vst.msk [vmem:[#allocation4 + $0x8] sm:$0xff] %vm139, %v138
    // Predicated region
    $region26: #{tpu_custom_call.1} parent=1 // pred_check
      _
    $region27: #{tpu_custom_call.1} parent=1 // pred_check_branch
      %143 = sbr.rel (0) target = $region29
    $region28: #{tpu_custom_call.1} parent=1 // pred_region
      %145 = vsyncadd [#allocation3], 0
      %s146 = sshll.u32 [#allocation2], 4
      %s147 = int_to_ptr.vmem [resolvable:$true] %s146
      %s148 = sshll.u32 %s6, 4
      %s149 = int_to_ptr.hbm [resolvable:$true] %s148
      %154 = dma.vmem_to_hbm [thread:$0]  %s147, 256, %s149, [#allocation3], 128, 128, 8
    $region29: #{tpu_custom_call.1} parent=1 // pred_fallthru
      _
    // Predicated region
    $region30: #{tpu_custom_call.1} parent=1 // pred_check
      _
    $region31: #{tpu_custom_call.1} parent=1 // pred_check_branch
      %156 = sbr.rel (0) target = $region33
    $region32: #{tpu_custom_call.1} parent=1 // pred_region
      %158 = vsyncadd [#allocation5], 0
      %s159 = sshll.u32 [#allocation4], 4
      %s160 = int_to_ptr.vmem [resolvable:$true] %s159
      %s161 = sshll.u32 %s7, 4
      %s162 = int_to_ptr.hbm [resolvable:$true] %s161
      %167 = dma.vmem_to_hbm [thread:$0]  %s160, 256, %s162, [#allocation5], 128, 128, 8
    $region33: #{tpu_custom_call.1} parent=1 // pred_fallthru
      _
    // Predicated region
    $region34: #{tpu_custom_call.1} parent=1 // pred_check
      _
    $region35: #{tpu_custom_call.1} parent=1 // pred_check_branch
      %169 = sbr.rel (0) target = $region37
    $region36: #{tpu_custom_call.1} parent=1 // pred_region
      %171 = dma.done [#allocation3], 256
    $region37: #{tpu_custom_call.1} parent=1 // pred_fallthru
      _
    // Predicated region
    $region38: #{tpu_custom_call.1} parent=1 // pred_check
      _
    $region39: #{tpu_custom_call.1} parent=1 // pred_check_branch
      %173 = sbr.rel (0) target = $region41
    $region40: #{tpu_custom_call.1} parent=1 // pred_region
      %175 = dma.done [#allocation5], 256
    $region41: #{tpu_custom_call.1} parent=1 // pred_fallthru
      _
    %176 = vsyncpa [#allocation3], 1
    %177 = vsyncpa [#allocation5], 1

</llo_original>
